<compile_context>
chip_gen: v6e
topology: v6e:2x2x1
jax: 0.10.0
libtpu: 0.0.40
codegen_flags: <defaults>
</compile_context>

<pallas_src>
import functools

import numpy as np
import jax
import jax.numpy as jnp
from jax.experimental import pallas as pl
from jax.experimental.pallas import tpu as pltpu


def _graph_attention_kernel(x_ref, a_ref, w_ref, wself_ref, wneigh_ref, o_ref,
                            *, num_heads, channels, batch_tile):
    """Processes `batch_tile` batch elements per grid step; all tiles fit VMEM."""
    N = x_ref.shape[1]
    H, C = num_heads, channels

    # Shared weights, resident across the batch loop.
    W = w_ref[...]          # (F, H*C)
    Ws = wself_ref[...]     # (H*C, H)  block-diagonal
    Wn = wneigh_ref[...]    # (H*C, H)  block-diagonal

    # Diagonal mask (the reference's A[:, i, i] = 1), built once in-kernel.
    row = jax.lax.broadcasted_iota(jnp.int32, (N, N), 0)
    col = jax.lax.broadcasted_iota(jnp.int32, (N, N), 1)
    diag = row == col

    neg_big = jnp.float32(-1e10)

    for b in range(batch_tile):                       # static unroll, TB is small
        X = x_ref[b]                                  # (N, F) f32
        # Adjacency arrives as int8; nonzero == edge, diagonal forced on.
        adj = a_ref[b].astype(jnp.int32)              # cheap i8 -> i32 extend in VMEM
        edge = (adj != 0) | diag                      # (N, N) bool

        # Linear transform for all heads at once -> one MXU call.
        Xf = jnp.dot(X, W, preferred_element_type=jnp.float32)           # (N, H*C)
        # Attention projections for all heads via block-diagonal weights -> two MXU calls.
        a_self = jnp.dot(Xf, Ws, preferred_element_type=jnp.float32)     # (N, H)
        a_neigh = jnp.dot(Xf, Wn, preferred_element_type=jnp.float32)    # (N, H)
        a_neigh_t = a_neigh.T                                            # (H, N)

        ps = []
        for h in range(H):                            # static unroll over heads
            e = a_self[:, h:h + 1] + a_neigh_t[h:h + 1, :]   # (N, N)
            e = jnp.where(e >= 0, e, 0.2 * e)                # LeakyReLU(0.2)
            e = jnp.where(edge, e, neg_big)                  # adjacency mask as a select
            e = e - jnp.max(e, axis=-1, keepdims=True)
            p = jnp.exp(e)
            # Fold the 1/H head-mean into the softmax denominator; approx recip -> EUP slot.
            denom = jnp.sum(p, axis=-1, keepdims=True) * jnp.float32(H)
            ps.append(p * pl.reciprocal(denom, approx=True))
        # TODO(synk): Dropout(0.2) on attention coefficients omitted (eval-mode semantics).

        # One well-shaped MXU call instead of H tiny (N,N)@(N,C) matmuls + VPU accumulation.
        p_all = jnp.concatenate(ps, axis=1)                               # (N, H*N)
        v_all = jnp.concatenate([Xf[:, h * C:(h + 1) * C] for h in range(H)],
                                axis=0)                                   # (H*N, C)
        out = jnp.dot(p_all, v_all, preferred_element_type=jnp.float32)  # (N, C) = head mean
        o_ref[b] = out.astype(o_ref.dtype)
        # TODO(synk): for large N, tile the neighbor axis with an online (flash-style)
        # softmax so the (N, H*N) block also fits v7x's 64 MiB VMEM.


def _block_diag_cols(w):
    """(C, H) per-head column vectors -> (H*C, H) block-diagonal matrix (built on host)."""
    C, H = w.shape
    eye = jnp.eye(H, dtype=w.dtype)                            # (H, H)
    return (w.T[:, :, None] * eye[:, None, :]).reshape(H * C, H)


def _pick_batch_tile(B, N, F, C):
    """Largest batch tile whose (double-buffered) per-step tiles stay under scoped VMEM."""
    budget = 24 * 1024 * 1024
    per_b = N * N * 1 + N * F * 4 + N * C * 4                  # A int8 + X f32 + out f32
    tb = max(1, min(B, budget // max(1, 4 * per_b)))
    while B % tb:
        tb -= 1
    return tb


def graph_attention(X, A, W, Wself, Wneigh):
    """X: (B, N, F) f32, A: (B, N, N) adjacency (any dtype, nonzero == edge),
       W: (F, H, C), Wself/Wneigh: (C, H, 1).  Returns (B, N, C) f32."""
    B, N, F = X.shape
    _, H, C = W.shape

    # Ship the adjacency as int8: 4x less HBM traffic for the byte-dominant operand.
    # (Callers should ideally store/provide it as int8 or bool already.)
    if A.dtype != jnp.int8:
        A = (A != 0).astype(jnp.int8)

    W_flat = jnp.asarray(W, jnp.float32).reshape(F, H * C)
    wself_bd = _block_diag_cols(jnp.asarray(Wself[:, :, 0], jnp.float32))    # (H*C, H)
    wneigh_bd = _block_diag_cols(jnp.asarray(Wneigh[:, :, 0], jnp.float32))  # (H*C, H)

    TB = _pick_batch_tile(B, N, F, C)
    kernel = functools.partial(_graph_attention_kernel,
                               num_heads=H, channels=C, batch_tile=TB)

    return pl.pallas_call(
        kernel,
        out_shape=jax.ShapeDtypeStruct((B, N, C), jnp.float32),
        grid_spec=pltpu.PrefetchScalarGridSpec(
            num_scalar_prefetch=0,
            grid=(B // TB,),
            in_specs=[
                pl.BlockSpec((TB, N, F), lambda b: (b, 0, 0)),    # X
                pl.BlockSpec((TB, N, N), lambda b: (b, 0, 0)),    # A (int8)
                pl.BlockSpec((F, H * C), lambda b: (0, 0)),       # kernel (shared)
                pl.BlockSpec((H * C, H), lambda b: (0, 0)),       # attn_kernel_self  (block-diag)
                pl.BlockSpec((H * C, H), lambda b: (0, 0)),       # attn_kernel_neighs (block-diag)
            ],
            out_specs=pl.BlockSpec((TB, N, C), lambda b: (b, 0, 0)),
        ),
        # Batch elements are independent -> shard the grid across TensorCores (v7x).
        compiler_params=pltpu.CompilerParams(dimension_semantics=("parallel",)),
    )(X, A, W_flat, wself_bd, wneigh_bd)


def _reference(X, A, W, Wself, Wneigh):
    """Pure-JAX transcription of the PyTorch forward (eval mode)."""
    N = A.shape[1]
    eye = jnp.eye(N, dtype=bool)
    A = jnp.where(eye[None, :, :], jnp.ones((), A.dtype), A)
    Xh = jnp.einsum('bni,iho->bnho', X, W, precision='highest')
    a_s = jnp.einsum('bnhi,iho->bnho', Xh, Wself, precision='highest')
    a_n = jnp.einsum('bnhi,iho->bnho', Xh, Wneigh, precision='highest')
    a_n = jnp.transpose(a_n, (0, 3, 2, 1))                 # '...abc -> ...cba'
    attn = a_s + a_n
    attn = jnp.where(attn >= 0, attn, 0.2 * attn)          # LeakyReLU(0.2)
    mask = -1e10 * (1.0 - A)
    attn = attn + mask[:, :, None, :]
    attn = jax.nn.softmax(attn, axis=-1)
    out = jnp.einsum('bnhm,bmhi->bnhi', attn, Xh, precision='highest')
    return jnp.mean(out, axis=2)


def _xavier_uniform(key, shape):
    # torch.nn.init.xavier_uniform_ fan computation for >2-D tensors
    rf = int(np.prod(shape[2:])) if len(shape) > 2 else 1
    fan_in = shape[1] * rf
    fan_out = shape[0] * rf
    bound = float(np.sqrt(6.0 / (fan_in + fan_out)))
    return jax.random.uniform(key, shape, jnp.float32, -bound, bound)


if __name__ == "__main__":
    B, N, F, C, H = 2, 8, 16, 8, 4   # batch, nodes, in-features, channels, attn heads

    root = jax.random.PRNGKey(0)
    kx, ka, kw, ks, kn = jax.random.split(root, 5)

    X = jax.random.normal(kx, (B, N, F), jnp.float32)
    # Random 0/1 adjacency, stored directly as int8 (what the kernel wants on the wire).
    A = (jax.random.uniform(ka, (B, N, N)) > 0.5).astype(jnp.int8)

    W = _xavier_uniform(kw, (F, H, C))        # self.kernel
    Wself = _xavier_uniform(ks, (C, H, 1))    # self.attn_kernel_self
    Wneigh = _xavier_uniform(kn, (C, H, 1))   # self.attn_kernel_neighs

    out = graph_attention(X, A, W, Wself, Wneigh)
    out = jax.block_until_ready(out)

    ref = jax.block_until_ready(_reference(X, A.astype(jnp.float32), W, Wself, Wneigh))
    np.testing.assert_allclose(np.asarray(out), np.asarray(ref), rtol=1e-3, atol=1e-3)

    print("KERNEL_OK")
</pallas_src>

<mosaic_0001>
module attributes {stable_mosaic.version = 11 : i64} {
  func.func @_graph_attention_kernel(%arg0: i32, %arg1: memref<2x8x16xf32, #tpu.memory_space<vmem>>, %arg2: memref<2x8x8xi8, #tpu.memory_space<vmem>>, %arg3: memref<16x32xf32, #tpu.memory_space<vmem>>, %arg4: memref<32x4xf32, #tpu.memory_space<vmem>>, %arg5: memref<32x4xf32, #tpu.memory_space<vmem>>, %arg6: memref<2x8x8xf32, #tpu.memory_space<vmem>>) attributes {dimension_semantics = [#tpu.dimension_semantics<parallel>], iteration_bounds = array<i64: 1>, scalar_prefetch = 0 : i64, scratch_operands = 0 : i64, tpu.core_type = #tpu.core_type<tc>, window_params = [{transform_indices = @transform_0, window_bounds = array<i64: 2, 8, 16>}, {transform_indices = @transform_1, window_bounds = array<i64: 2, 8, 8>}, {pipeline_mode = #tpu.pipeline_mode<synchronous>, transform_indices = @transform_2, window_bounds = array<i64: 16, 32>}, {pipeline_mode = #tpu.pipeline_mode<synchronous>, transform_indices = @transform_3, window_bounds = array<i64: 32, 4>}, {pipeline_mode = #tpu.pipeline_mode<synchronous>, transform_indices = @transform_4, window_bounds = array<i64: 32, 4>}, {transform_indices = @transform_5, window_bounds = array<i64: 2, 8, 8>}]} {
    %c0 = arith.constant 0 : index
    %c0_0 = arith.constant 0 : index
    %0 = vector.load %arg3[%c0, %c0_0] : memref<16x32xf32, #tpu.memory_space<vmem>>, vector<16x32xf32>
    %c0_1 = arith.constant 0 : index
    %c0_2 = arith.constant 0 : index
    %1 = vector.load %arg4[%c0_1, %c0_2] : memref<32x4xf32, #tpu.memory_space<vmem>>, vector<32x4xf32>
    %c0_3 = arith.constant 0 : index
    %c0_4 = arith.constant 0 : index
    %2 = vector.load %arg5[%c0_3, %c0_4] : memref<32x4xf32, #tpu.memory_space<vmem>>, vector<32x4xf32>
    %3 = tpu.iota {dimensions = array<i32: 0>} : vector<8x8xi32>
    %4 = tpu.iota {dimensions = array<i32: 1>} : vector<8x8xi32>
    %5 = arith.cmpi eq, %3, %4 : vector<8x8xi32>
    %c0_5 = arith.constant 0 : index
    %c0_6 = arith.constant 0 : index
    %c0_7 = arith.constant 0 : index
    %6 = vector.load %arg1[%c0_5, %c0_6, %c0_7] : memref<2x8x16xf32, #tpu.memory_space<vmem>>, vector<1x8x16xf32>
    %7 = vector.shape_cast %6 : vector<1x8x16xf32> to vector<8x16xf32>
    %c0_8 = arith.constant 0 : index
    %c0_9 = arith.constant 0 : index
    %c0_10 = arith.constant 0 : index
    %8 = vector.load %arg2[%c0_8, %c0_9, %c0_10] : memref<2x8x8xi8, #tpu.memory_space<vmem>>, vector<1x8x8xi8>
    %9 = vector.shape_cast %8 : vector<1x8x8xi8> to vector<8x8xi8>
    %10 = arith.extsi %9 : vector<8x8xi8> to vector<8x8xi32>
    %c0_i32 = arith.constant 0 : i32
    %11 = vector.broadcast %c0_i32 : i32 to vector<8x8xi32>
    %12 = arith.cmpi ne, %10, %11 : vector<8x8xi32>
    %13 = arith.ori %12, %5 : vector<8x8xi1>
    %cst = arith.constant dense<0.000000e+00> : vector<8x32xf32>
    %14 = tpu.matmul %7, %0, %cst {dimension_numbers = #tpu.dot_dimension_numbers<[1], [0], [0], [1], [0, 0, 1, 1], [], []>} : vector<8x16xf32>, vector<16x32xf32>, vector<8x32xf32> -> vector<8x32xf32>
    %cst_11 = arith.constant dense<0.000000e+00> : vector<8x4xf32>
    %15 = tpu.matmul %14, %1, %cst_11 {dimension_numbers = #tpu.dot_dimension_numbers<[1], [0], [0], [1], [0, 0, 1, 1], [], []>} : vector<8x32xf32>, vector<32x4xf32>, vector<8x4xf32> -> vector<8x4xf32>
    %cst_12 = arith.constant dense<0.000000e+00> : vector<8x4xf32>
    %16 = tpu.matmul %14, %2, %cst_12 {dimension_numbers = #tpu.dot_dimension_numbers<[1], [0], [0], [1], [0, 0, 1, 1], [], []>} : vector<8x32xf32>, vector<32x4xf32>, vector<8x4xf32> -> vector<8x4xf32>
    %17 = tpu.transpose %16, [1, 0] : vector<8x4xf32> -> vector<4x8xf32>
    %18 = vector.extract_strided_slice %15 {offsets = [0, 0], sizes = [8, 1], strides = [1, 1]} : vector<8x4xf32> to vector<8x1xf32>
    %19 = vector.extract_strided_slice %17 {offsets = [0, 0], sizes = [1, 8], strides = [1, 1]} : vector<4x8xf32> to vector<1x8xf32>
    %20 = vector.broadcast %18 : vector<8x1xf32> to vector<8x8xf32>
    %21 = vector.broadcast %19 : vector<1x8xf32> to vector<8x8xf32>
    %22 = arith.addf %20, %21 : vector<8x8xf32>
    %cst_13 = arith.constant 0.000000e+00 : f32
    %23 = vector.broadcast %cst_13 : f32 to vector<8x8xf32>
    %24 = arith.cmpf oge, %22, %23 : vector<8x8xf32>
    %cst_14 = arith.constant 2.000000e-01 : f32
    %25 = vector.broadcast %cst_14 : f32 to vector<8x8xf32>
    %26 = arith.mulf %25, %22 : vector<8x8xf32>
    %27 = arith.select %24, %22, %26 : vector<8x8xi1>, vector<8x8xf32>
    %cst_15 = arith.constant -1.000000e+10 : f32
    %28 = vector.broadcast %cst_15 : f32 to vector<8x8xf32>
    %29 = arith.select %13, %27, %28 : vector<8x8xi1>, vector<8x8xf32>
    %cst_16 = arith.constant dense<0xFF800000> : vector<8xf32>
    %30 = vector.multi_reduction <maximumf>, %29, %cst_16 [1] : vector<8x8xf32> to vector<8xf32>
    %31 = vector.shape_cast %30 : vector<8xf32> to vector<8x1xf32>
    %32 = vector.broadcast %31 : vector<8x1xf32> to vector<8x8xf32>
    %33 = arith.subf %29, %32 : vector<8x8xf32>
    %34 = math.exp %33 : vector<8x8xf32>
    %cst_17 = arith.constant dense<0.000000e+00> : vector<8xf32>
    %35 = vector.multi_reduction <add>, %34, %cst_17 [1] : vector<8x8xf32> to vector<8xf32>
    %36 = vector.shape_cast %35 : vector<8xf32> to vector<8x1xf32>
    %cst_18 = arith.constant 4.000000e+00 : f32
    %37 = vector.broadcast %cst_18 : f32 to vector<8x1xf32>
    %38 = arith.mulf %36, %37 : vector<8x1xf32>
    %39 = tpu.reciprocal %38 {approx = true} : vector<8x1xf32> -> vector<8x1xf32>
    %40 = vector.broadcast %39 : vector<8x1xf32> to vector<8x8xf32>
    %41 = arith.mulf %34, %40 : vector<8x8xf32>
    %42 = vector.extract_strided_slice %15 {offsets = [0, 1], sizes = [8, 1], strides = [1, 1]} : vector<8x4xf32> to vector<8x1xf32>
    %43 = vector.extract_strided_slice %17 {offsets = [1, 0], sizes = [1, 8], strides = [1, 1]} : vector<4x8xf32> to vector<1x8xf32>
    %44 = vector.broadcast %42 : vector<8x1xf32> to vector<8x8xf32>
    %45 = vector.broadcast %43 : vector<1x8xf32> to vector<8x8xf32>
    %46 = arith.addf %44, %45 : vector<8x8xf32>
    %cst_19 = arith.constant 0.000000e+00 : f32
    %47 = vector.broadcast %cst_19 : f32 to vector<8x8xf32>
    %48 = arith.cmpf oge, %46, %47 : vector<8x8xf32>
    %cst_20 = arith.constant 2.000000e-01 : f32
    %49 = vector.broadcast %cst_20 : f32 to vector<8x8xf32>
    %50 = arith.mulf %49, %46 : vector<8x8xf32>
    %51 = arith.select %48, %46, %50 : vector<8x8xi1>, vector<8x8xf32>
    %cst_21 = arith.constant -1.000000e+10 : f32
    %52 = vector.broadcast %cst_21 : f32 to vector<8x8xf32>
    %53 = arith.select %13, %51, %52 : vector<8x8xi1>, vector<8x8xf32>
    %cst_22 = arith.constant dense<0xFF800000> : vector<8xf32>
    %54 = vector.multi_reduction <maximumf>, %53, %cst_22 [1] : vector<8x8xf32> to vector<8xf32>
    %55 = vector.shape_cast %54 : vector<8xf32> to vector<8x1xf32>
    %56 = vector.broadcast %55 : vector<8x1xf32> to vector<8x8xf32>
    %57 = arith.subf %53, %56 : vector<8x8xf32>
    %58 = math.exp %57 : vector<8x8xf32>
    %cst_23 = arith.constant dense<0.000000e+00> : vector<8xf32>
    %59 = vector.multi_reduction <add>, %58, %cst_23 [1] : vector<8x8xf32> to vector<8xf32>
    %60 = vector.shape_cast %59 : vector<8xf32> to vector<8x1xf32>
    %cst_24 = arith.constant 4.000000e+00 : f32
    %61 = vector.broadcast %cst_24 : f32 to vector<8x1xf32>
    %62 = arith.mulf %60, %61 : vector<8x1xf32>
    %63 = tpu.reciprocal %62 {approx = true} : vector<8x1xf32> -> vector<8x1xf32>
    %64 = vector.broadcast %63 : vector<8x1xf32> to vector<8x8xf32>
    %65 = arith.mulf %58, %64 : vector<8x8xf32>
    %66 = vector.extract_strided_slice %15 {offsets = [0, 2], sizes = [8, 1], strides = [1, 1]} : vector<8x4xf32> to vector<8x1xf32>
    %67 = vector.extract_strided_slice %17 {offsets = [2, 0], sizes = [1, 8], strides = [1, 1]} : vector<4x8xf32> to vector<1x8xf32>
    %68 = vector.broadcast %66 : vector<8x1xf32> to vector<8x8xf32>
    %69 = vector.broadcast %67 : vector<1x8xf32> to vector<8x8xf32>
    %70 = arith.addf %68, %69 : vector<8x8xf32>
    %cst_25 = arith.constant 0.000000e+00 : f32
    %71 = vector.broadcast %cst_25 : f32 to vector<8x8xf32>
    %72 = arith.cmpf oge, %70, %71 : vector<8x8xf32>
    %cst_26 = arith.constant 2.000000e-01 : f32
    %73 = vector.broadcast %cst_26 : f32 to vector<8x8xf32>
    %74 = arith.mulf %73, %70 : vector<8x8xf32>
    %75 = arith.select %72, %70, %74 : vector<8x8xi1>, vector<8x8xf32>
    %cst_27 = arith.constant -1.000000e+10 : f32
    %76 = vector.broadcast %cst_27 : f32 to vector<8x8xf32>
    %77 = arith.select %13, %75, %76 : vector<8x8xi1>, vector<8x8xf32>
    %cst_28 = arith.constant dense<0xFF800000> : vector<8xf32>
    %78 = vector.multi_reduction <maximumf>, %77, %cst_28 [1] : vector<8x8xf32> to vector<8xf32>
    %79 = vector.shape_cast %78 : vector<8xf32> to vector<8x1xf32>
    %80 = vector.broadcast %79 : vector<8x1xf32> to vector<8x8xf32>
    %81 = arith.subf %77, %80 : vector<8x8xf32>
    %82 = math.exp %81 : vector<8x8xf32>
    %cst_29 = arith.constant dense<0.000000e+00> : vector<8xf32>
    %83 = vector.multi_reduction <add>, %82, %cst_29 [1] : vector<8x8xf32> to vector<8xf32>
    %84 = vector.shape_cast %83 : vector<8xf32> to vector<8x1xf32>
    %cst_30 = arith.constant 4.000000e+00 : f32
    %85 = vector.broadcast %cst_30 : f32 to vector<8x1xf32>
    %86 = arith.mulf %84, %85 : vector<8x1xf32>
    %87 = tpu.reciprocal %86 {approx = true} : vector<8x1xf32> -> vector<8x1xf32>
    %88 = vector.broadcast %87 : vector<8x1xf32> to vector<8x8xf32>
    %89 = arith.mulf %82, %88 : vector<8x8xf32>
    %90 = vector.extract_strided_slice %15 {offsets = [0, 3], sizes = [8, 1], strides = [1, 1]} : vector<8x4xf32> to vector<8x1xf32>
    %91 = vector.extract_strided_slice %17 {offsets = [3, 0], sizes = [1, 8], strides = [1, 1]} : vector<4x8xf32> to vector<1x8xf32>
    %92 = vector.broadcast %90 : vector<8x1xf32> to vector<8x8xf32>
    %93 = vector.broadcast %91 : vector<1x8xf32> to vector<8x8xf32>
    %94 = arith.addf %92, %93 : vector<8x8xf32>
    %cst_31 = arith.constant 0.000000e+00 : f32
    %95 = vector.broadcast %cst_31 : f32 to vector<8x8xf32>
    %96 = arith.cmpf oge, %94, %95 : vector<8x8xf32>
    %cst_32 = arith.constant 2.000000e-01 : f32
    %97 = vector.broadcast %cst_32 : f32 to vector<8x8xf32>
    %98 = arith.mulf %97, %94 : vector<8x8xf32>
    %99 = arith.select %96, %94, %98 : vector<8x8xi1>, vector<8x8xf32>
    %cst_33 = arith.constant -1.000000e+10 : f32
    %100 = vector.broadcast %cst_33 : f32 to vector<8x8xf32>
    %101 = arith.select %13, %99, %100 : vector<8x8xi1>, vector<8x8xf32>
    %cst_34 = arith.constant dense<0xFF800000> : vector<8xf32>
    %102 = vector.multi_reduction <maximumf>, %101, %cst_34 [1] : vector<8x8xf32> to vector<8xf32>
    %103 = vector.shape_cast %102 : vector<8xf32> to vector<8x1xf32>
    %104 = vector.broadcast %103 : vector<8x1xf32> to vector<8x8xf32>
    %105 = arith.subf %101, %104 : vector<8x8xf32>
    %106 = math.exp %105 : vector<8x8xf32>
    %cst_35 = arith.constant dense<0.000000e+00> : vector<8xf32>
    %107 = vector.multi_reduction <add>, %106, %cst_35 [1] : vector<8x8xf32> to vector<8xf32>
    %108 = vector.shape_cast %107 : vector<8xf32> to vector<8x1xf32>
    %cst_36 = arith.constant 4.000000e+00 : f32
    %109 = vector.broadcast %cst_36 : f32 to vector<8x1xf32>
    %110 = arith.mulf %108, %109 : vector<8x1xf32>
    %111 = tpu.reciprocal %110 {approx = true} : vector<8x1xf32> -> vector<8x1xf32>
    %112 = vector.broadcast %111 : vector<8x1xf32> to vector<8x8xf32>
    %113 = arith.mulf %106, %112 : vector<8x8xf32>
    %114 = tpu.concatenate %41, %65, %89, %113 in 1 : vector<8x8xf32>, vector<8x8xf32>, vector<8x8xf32>, vector<8x8xf32> -> vector<8x32xf32>
    %115 = vector.extract_strided_slice %14 {offsets = [0, 0], sizes = [8, 8], strides = [1, 1]} : vector<8x32xf32> to vector<8x8xf32>
    %116 = vector.extract_strided_slice %14 {offsets = [0, 8], sizes = [8, 8], strides = [1, 1]} : vector<8x32xf32> to vector<8x8xf32>
    %117 = vector.extract_strided_slice %14 {offsets = [0, 16], sizes = [8, 8], strides = [1, 1]} : vector<8x32xf32> to vector<8x8xf32>
    %118 = vector.extract_strided_slice %14 {offsets = [0, 24], sizes = [8, 8], strides = [1, 1]} : vector<8x32xf32> to vector<8x8xf32>
    %119 = tpu.concatenate %115, %116, %117, %118 in 0 : vector<8x8xf32>, vector<8x8xf32>, vector<8x8xf32>, vector<8x8xf32> -> vector<32x8xf32>
    %cst_37 = arith.constant dense<0.000000e+00> : vector<8x8xf32>
    %120 = tpu.matmul %114, %119, %cst_37 {dimension_numbers = #tpu.dot_dimension_numbers<[1], [0], [0], [1], [0, 0, 1, 1], [], []>} : vector<8x32xf32>, vector<32x8xf32>, vector<8x8xf32> -> vector<8x8xf32>
    %c0_38 = arith.constant 0 : index
    %c0_39 = arith.constant 0 : index
    %c0_40 = arith.constant 0 : index
    %121 = vector.load %arg6[%c0_38, %c0_39, %c0_40] : memref<2x8x8xf32, #tpu.memory_space<vmem>>, vector<1x8x8xf32>
    %122 = vector.shape_cast %121 : vector<1x8x8xf32> to vector<8x8xf32>
    %123 = vector.shape_cast %120 : vector<8x8xf32> to vector<1x8x8xf32>
    tpu.vector_store %arg6[%c0_38, %c0_39, %c0_40], %123 {strides = array<i32>} : memref<2x8x8xf32, #tpu.memory_space<vmem>>, vector<1x8x8xf32>,
    %c1 = arith.constant 1 : index
    %c0_41 = arith.constant 0 : index
    %c0_42 = arith.constant 0 : index
    %124 = vector.load %arg1[%c1, %c0_41, %c0_42] : memref<2x8x16xf32, #tpu.memory_space<vmem>>, vector<1x8x16xf32>
    %125 = vector.shape_cast %124 : vector<1x8x16xf32> to vector<8x16xf32>
    %c1_43 = arith.constant 1 : index
    %c0_44 = arith.constant 0 : index
    %c0_45 = arith.constant 0 : index
    %126 = vector.load %arg2[%c1_43, %c0_44, %c0_45] : memref<2x8x8xi8, #tpu.memory_space<vmem>>, vector<1x8x8xi8>
    %127 = vector.shape_cast %126 : vector<1x8x8xi8> to vector<8x8xi8>
    %128 = arith.extsi %127 : vector<8x8xi8> to vector<8x8xi32>
    %c0_i32_46 = arith.constant 0 : i32
    %129 = vector.broadcast %c0_i32_46 : i32 to vector<8x8xi32>
    %130 = arith.cmpi ne, %128, %129 : vector<8x8xi32>
    %131 = arith.ori %130, %5 : vector<8x8xi1>
    %cst_47 = arith.constant dense<0.000000e+00> : vector<8x32xf32>
    %132 = tpu.matmul %125, %0, %cst_47 {dimension_numbers = #tpu.dot_dimension_numbers<[1], [0], [0], [1], [0, 0, 1, 1], [], []>} : vector<8x16xf32>, vector<16x32xf32>, vector<8x32xf32> -> vector<8x32xf32>
    %cst_48 = arith.constant dense<0.000000e+00> : vector<8x4xf32>
    %133 = tpu.matmul %132, %1, %cst_48 {dimension_numbers = #tpu.dot_dimension_numbers<[1], [0], [0], [1], [0, 0, 1, 1], [], []>} : vector<8x32xf32>, vector<32x4xf32>, vector<8x4xf32> -> vector<8x4xf32>
    %cst_49 = arith.constant dense<0.000000e+00> : vector<8x4xf32>
    %134 = tpu.matmul %132, %2, %cst_49 {dimension_numbers = #tpu.dot_dimension_numbers<[1], [0], [0], [1], [0, 0, 1, 1], [], []>} : vector<8x32xf32>, vector<32x4xf32>, vector<8x4xf32> -> vector<8x4xf32>
    %135 = tpu.transpose %134, [1, 0] : vector<8x4xf32> -> vector<4x8xf32>
    %136 = vector.extract_strided_slice %133 {offsets = [0, 0], sizes = [8, 1], strides = [1, 1]} : vector<8x4xf32> to vector<8x1xf32>
    %137 = vector.extract_strided_slice %135 {offsets = [0, 0], sizes = [1, 8], strides = [1, 1]} : vector<4x8xf32> to vector<1x8xf32>
    %138 = vector.broadcast %136 : vector<8x1xf32> to vector<8x8xf32>
    %139 = vector.broadcast %137 : vector<1x8xf32> to vector<8x8xf32>
    %140 = arith.addf %138, %139 : vector<8x8xf32>
    %cst_50 = arith.constant 0.000000e+00 : f32
    %141 = vector.broadcast %cst_50 : f32 to vector<8x8xf32>
    %142 = arith.cmpf oge, %140, %141 : vector<8x8xf32>
    %cst_51 = arith.constant 2.000000e-01 : f32
    %143 = vector.broadcast %cst_51 : f32 to vector<8x8xf32>
    %144 = arith.mulf %143, %140 : vector<8x8xf32>
    %145 = arith.select %142, %140, %144 : vector<8x8xi1>, vector<8x8xf32>
    %cst_52 = arith.constant -1.000000e+10 : f32
    %146 = vector.broadcast %cst_52 : f32 to vector<8x8xf32>
    %147 = arith.select %131, %145, %146 : vector<8x8xi1>, vector<8x8xf32>
    %cst_53 = arith.constant dense<0xFF800000> : vector<8xf32>
    %148 = vector.multi_reduction <maximumf>, %147, %cst_53 [1] : vector<8x8xf32> to vector<8xf32>
    %149 = vector.shape_cast %148 : vector<8xf32> to vector<8x1xf32>
    %150 = vector.broadcast %149 : vector<8x1xf32> to vector<8x8xf32>
    %151 = arith.subf %147, %150 : vector<8x8xf32>
    %152 = math.exp %151 : vector<8x8xf32>
    %cst_54 = arith.constant dense<0.000000e+00> : vector<8xf32>
    %153 = vector.multi_reduction <add>, %152, %cst_54 [1] : vector<8x8xf32> to vector<8xf32>
    %154 = vector.shape_cast %153 : vector<8xf32> to vector<8x1xf32>
    %cst_55 = arith.constant 4.000000e+00 : f32
    %155 = vector.broadcast %cst_55 : f32 to vector<8x1xf32>
    %156 = arith.mulf %154, %155 : vector<8x1xf32>
    %157 = tpu.reciprocal %156 {approx = true} : vector<8x1xf32> -> vector<8x1xf32>
    %158 = vector.broadcast %157 : vector<8x1xf32> to vector<8x8xf32>
    %159 = arith.mulf %152, %158 : vector<8x8xf32>
    %160 = vector.extract_strided_slice %133 {offsets = [0, 1], sizes = [8, 1], strides = [1, 1]} : vector<8x4xf32> to vector<8x1xf32>
    %161 = vector.extract_strided_slice %135 {offsets = [1, 0], sizes = [1, 8], strides = [1, 1]} : vector<4x8xf32> to vector<1x8xf32>
    %162 = vector.broadcast %160 : vector<8x1xf32> to vector<8x8xf32>
    %163 = vector.broadcast %161 : vector<1x8xf32> to vector<8x8xf32>
    %164 = arith.addf %162, %163 : vector<8x8xf32>
    %cst_56 = arith.constant 0.000000e+00 : f32
    %165 = vector.broadcast %cst_56 : f32 to vector<8x8xf32>
    %166 = arith.cmpf oge, %164, %165 : vector<8x8xf32>
    %cst_57 = arith.constant 2.000000e-01 : f32
    %167 = vector.broadcast %cst_57 : f32 to vector<8x8xf32>
    %168 = arith.mulf %167, %164 : vector<8x8xf32>
    %169 = arith.select %166, %164, %168 : vector<8x8xi1>, vector<8x8xf32>
    %cst_58 = arith.constant -1.000000e+10 : f32
    %170 = vector.broadcast %cst_58 : f32 to vector<8x8xf32>
    %171 = arith.select %131, %169, %170 : vector<8x8xi1>, vector<8x8xf32>
    %cst_59 = arith.constant dense<0xFF800000> : vector<8xf32>
    %172 = vector.multi_reduction <maximumf>, %171, %cst_59 [1] : vector<8x8xf32> to vector<8xf32>
    %173 = vector.shape_cast %172 : vector<8xf32> to vector<8x1xf32>
    %174 = vector.broadcast %173 : vector<8x1xf32> to vector<8x8xf32>
    %175 = arith.subf %171, %174 : vector<8x8xf32>
    %176 = math.exp %175 : vector<8x8xf32>
    %cst_60 = arith.constant dense<0.000000e+00> : vector<8xf32>
    %177 = vector.multi_reduction <add>, %176, %cst_60 [1] : vector<8x8xf32> to vector<8xf32>
    %178 = vector.shape_cast %177 : vector<8xf32> to vector<8x1xf32>
    %cst_61 = arith.constant 4.000000e+00 : f32
    %179 = vector.broadcast %cst_61 : f32 to vector<8x1xf32>
    %180 = arith.mulf %178, %179 : vector<8x1xf32>
    %181 = tpu.reciprocal %180 {approx = true} : vector<8x1xf32> -> vector<8x1xf32>
    %182 = vector.broadcast %181 : vector<8x1xf32> to vector<8x8xf32>
    %183 = arith.mulf %176, %182 : vector<8x8xf32>
    %184 = vector.extract_strided_slice %133 {offsets = [0, 2], sizes = [8, 1], strides = [1, 1]} : vector<8x4xf32> to vector<8x1xf32>
    %185 = vector.extract_strided_slice %135 {offsets = [2, 0], sizes = [1, 8], strides = [1, 1]} : vector<4x8xf32> to vector<1x8xf32>
    %186 = vector.broadcast %184 : vector<8x1xf32> to vector<8x8xf32>
    %187 = vector.broadcast %185 : vector<1x8xf32> to vector<8x8xf32>
    %188 = arith.addf %186, %187 : vector<8x8xf32>
    %cst_62 = arith.constant 0.000000e+00 : f32
    %189 = vector.broadcast %cst_62 : f32 to vector<8x8xf32>
    %190 = arith.cmpf oge, %188, %189 : vector<8x8xf32>
    %cst_63 = arith.constant 2.000000e-01 : f32
    %191 = vector.broadcast %cst_63 : f32 to vector<8x8xf32>
    %192 = arith.mulf %191, %188 : vector<8x8xf32>
    %193 = arith.select %190, %188, %192 : vector<8x8xi1>, vector<8x8xf32>
    %cst_64 = arith.constant -1.000000e+10 : f32
    %194 = vector.broadcast %cst_64 : f32 to vector<8x8xf32>
    %195 = arith.select %131, %193, %194 : vector<8x8xi1>, vector<8x8xf32>
    %cst_65 = arith.constant dense<0xFF800000> : vector<8xf32>
    %196 = vector.multi_reduction <maximumf>, %195, %cst_65 [1] : vector<8x8xf32> to vector<8xf32>
    %197 = vector.shape_cast %196 : vector<8xf32> to vector<8x1xf32>
    %198 = vector.broadcast %197 : vector<8x1xf32> to vector<8x8xf32>
    %199 = arith.subf %195, %198 : vector<8x8xf32>
    %200 = math.exp %199 : vector<8x8xf32>
    %cst_66 = arith.constant dense<0.000000e+00> : vector<8xf32>
    %201 = vector.multi_reduction <add>, %200, %cst_66 [1] : vector<8x8xf32> to vector<8xf32>
    %202 = vector.shape_cast %201 : vector<8xf32> to vector<8x1xf32>
    %cst_67 = arith.constant 4.000000e+00 : f32
    %203 = vector.broadcast %cst_67 : f32 to vector<8x1xf32>
    %204 = arith.mulf %202, %203 : vector<8x1xf32>
    %205 = tpu.reciprocal %204 {approx = true} : vector<8x1xf32> -> vector<8x1xf32>
    %206 = vector.broadcast %205 : vector<8x1xf32> to vector<8x8xf32>
    %207 = arith.mulf %200, %206 : vector<8x8xf32>
    %208 = vector.extract_strided_slice %133 {offsets = [0, 3], sizes = [8, 1], strides = [1, 1]} : vector<8x4xf32> to vector<8x1xf32>
    %209 = vector.extract_strided_slice %135 {offsets = [3, 0], sizes = [1, 8], strides = [1, 1]} : vector<4x8xf32> to vector<1x8xf32>
    %210 = vector.broadcast %208 : vector<8x1xf32> to vector<8x8xf32>
    %211 = vector.broadcast %209 : vector<1x8xf32> to vector<8x8xf32>
    %212 = arith.addf %210, %211 : vector<8x8xf32>
    %cst_68 = arith.constant 0.000000e+00 : f32
    %213 = vector.broadcast %cst_68 : f32 to vector<8x8xf32>
    %214 = arith.cmpf oge, %212, %213 : vector<8x8xf32>
    %cst_69 = arith.constant 2.000000e-01 : f32
    %215 = vector.broadcast %cst_69 : f32 to vector<8x8xf32>
    %216 = arith.mulf %215, %212 : vector<8x8xf32>
    %217 = arith.select %214, %212, %216 : vector<8x8xi1>, vector<8x8xf32>
    %cst_70 = arith.constant -1.000000e+10 : f32
    %218 = vector.broadcast %cst_70 : f32 to vector<8x8xf32>
    %219 = arith.select %131, %217, %218 : vector<8x8xi1>, vector<8x8xf32>
    %cst_71 = arith.constant dense<0xFF800000> : vector<8xf32>
    %220 = vector.multi_reduction <maximumf>, %219, %cst_71 [1] : vector<8x8xf32> to vector<8xf32>
    %221 = vector.shape_cast %220 : vector<8xf32> to vector<8x1xf32>
    %222 = vector.broadcast %221 : vector<8x1xf32> to vector<8x8xf32>
    %223 = arith.subf %219, %222 : vector<8x8xf32>
    %224 = math.exp %223 : vector<8x8xf32>
    %cst_72 = arith.constant dense<0.000000e+00> : vector<8xf32>
    %225 = vector.multi_reduction <add>, %224, %cst_72 [1] : vector<8x8xf32> to vector<8xf32>
    %226 = vector.shape_cast %225 : vector<8xf32> to vector<8x1xf32>
    %cst_73 = arith.constant 4.000000e+00 : f32
    %227 = vector.broadcast %cst_73 : f32 to vector<8x1xf32>
    %228 = arith.mulf %226, %227 : vector<8x1xf32>
    %229 = tpu.reciprocal %228 {approx = true} : vector<8x1xf32> -> vector<8x1xf32>
    %230 = vector.broadcast %229 : vector<8x1xf32> to vector<8x8xf32>
    %231 = arith.mulf %224, %230 : vector<8x8xf32>
    %232 = tpu.concatenate %159, %183, %207, %231 in 1 : vector<8x8xf32>, vector<8x8xf32>, vector<8x8xf32>, vector<8x8xf32> -> vector<8x32xf32>
    %233 = vector.extract_strided_slice %132 {offsets = [0, 0], sizes = [8, 8], strides = [1, 1]} : vector<8x32xf32> to vector<8x8xf32>
    %234 = vector.extract_strided_slice %132 {offsets = [0, 8], sizes = [8, 8], strides = [1, 1]} : vector<8x32xf32> to vector<8x8xf32>
    %235 = vector.extract_strided_slice %132 {offsets = [0, 16], sizes = [8, 8], strides = [1, 1]} : vector<8x32xf32> to vector<8x8xf32>
    %236 = vector.extract_strided_slice %132 {offsets = [0, 24], sizes = [8, 8], strides = [1, 1]} : vector<8x32xf32> to vector<8x8xf32>
    %237 = tpu.concatenate %233, %234, %235, %236 in 0 : vector<8x8xf32>, vector<8x8xf32>, vector<8x8xf32>, vector<8x8xf32> -> vector<32x8xf32>
    %cst_74 = arith.constant dense<0.000000e+00> : vector<8x8xf32>
    %238 = tpu.matmul %232, %237, %cst_74 {dimension_numbers = #tpu.dot_dimension_numbers<[1], [0], [0], [1], [0, 0, 1, 1], [], []>} : vector<8x32xf32>, vector<32x8xf32>, vector<8x8xf32> -> vector<8x8xf32>
    %c1_75 = arith.constant 1 : index
    %c0_76 = arith.constant 0 : index
    %c0_77 = arith.constant 0 : index
    %239 = vector.load %arg6[%c1_75, %c0_76, %c0_77] : memref<2x8x8xf32, #tpu.memory_space<vmem>>, vector<1x8x8xf32>
    %240 = vector.shape_cast %239 : vector<1x8x8xf32> to vector<8x8xf32>
    %241 = vector.shape_cast %238 : vector<8x8xf32> to vector<1x8x8xf32>
    tpu.vector_store %arg6[%c1_75, %c0_76, %c0_77], %241 {strides = array<i32>} : memref<2x8x8xf32, #tpu.memory_space<vmem>>, vector<1x8x8xf32>,
    return
  }
  func.func @transform_0(%arg0: i32) -> (i32, i32, i32) {
    %c0_i32 = arith.constant 0 : i32
    %c0_i32_0 = arith.constant 0 : i32
    %c0_i32_1 = arith.constant 0 : i32
    return %arg0, %c0_i32, %c0_i32_0 : i32, i32, i32
  }
  func.func @transform_1(%arg0: i32) -> (i32, i32, i32) {
    %c0_i32 = arith.constant 0 : i32
    %c0_i32_0 = arith.constant 0 : i32
    %c0_i32_1 = arith.constant 0 : i32
    return %arg0, %c0_i32, %c0_i32_0 : i32, i32, i32
  }
  func.func @transform_2(%arg0: i32) -> (i32, i32) {
    %c0_i32 = arith.constant 0 : i32
    %c0_i32_0 = arith.constant 0 : i32
    %c0_i32_1 = arith.constant 0 : i32
    return %c0_i32, %c0_i32_0 : i32, i32
  }
  func.func @transform_3(%arg0: i32) -> (i32, i32) {
    %c0_i32 = arith.constant 0 : i32
    %c0_i32_0 = arith.constant 0 : i32
    %c0_i32_1 = arith.constant 0 : i32
    return %c0_i32, %c0_i32_0 : i32, i32
  }
  func.func @transform_4(%arg0: i32) -> (i32, i32) {
    %c0_i32 = arith.constant 0 : i32
    %c0_i32_0 = arith.constant 0 : i32
    %c0_i32_1 = arith.constant 0 : i32
    return %c0_i32, %c0_i32_0 : i32, i32
  }
  func.func @transform_5(%arg0: i32) -> (i32, i32, i32) {
    %c0_i32 = arith.constant 0 : i32
    %c0_i32_0 = arith.constant 0 : i32
    %c0_i32_1 = arith.constant 0 : i32
    return %arg0, %c0_i32, %c0_i32_0 : i32, i32, i32
  }
}

</mosaic_0001>

<llo_original>
// kernel: tpu_custom_call.1
$region0: #{tpu_custom_call.1}
  #allocation0 [shape = 'u32[]', space=smem, size = 0x4, offset = 0x4, fixed_abs, tag = 'smem constant byte address 0x4 - core index']
  #allocation1 [shape = 'u32[144,128]{1,0:T(1,128)}', space=vmem, size = 0x12000, scoped, tag = 'internal scratch']
  %s0 = inlined_call_operand.vmem [shape: f32[2,8,16], index: 0, kind: input, shape index: {}]
  %s1 = inlined_call_operand.vmem [shape: s8[2,8,8], index: 1, kind: input, shape index: {}]
  %s2 = inlined_call_operand.vmem [shape: f32[16,32], index: 2, kind: input, shape index: {}]
  %s3 = inlined_call_operand.vmem [shape: f32[32,4], index: 3, kind: input, shape index: {}]
  %s4 = inlined_call_operand.vmem [shape: f32[32,4], index: 4, kind: input, shape index: {}]
  %s5 = inlined_call_operand.hbm [shape: f32[2,8,8], index: 5, kind: output, shape index: {}]
  %s6 = sld [smem:[#allocation0]]
  $region30: #{tpu_custom_call.1} parent=0
    _
  %s8 = ssub.s32 1, %s6
  %s9 = scalar_select 0, %s8, %s6
  $region1: #{tpu_custom_call.1} parent=0
    #allocation2 [shape = 'u8[8192]{0}', space=vmem, size = 0x2000, scoped, tag = 'output window, operand 0, single buffered']
    #allocation3 [shape = 's32[1]{0}', space=sflag, size = 0x4, scoped, tag = 'scoped memory for tpu_custom_call.1']
    %10 = vsyncpa [#allocation3], 0
    // Predicated region
    $region2: #{tpu_custom_call.1} parent=1 // pred_check
      _
    $region3: #{tpu_custom_call.1} parent=1 // pred_check_branch
      %12 = sbr.rel (0) target = $region5
    $region4: #{tpu_custom_call.1} parent=1 // pred_region
      _
    $region5: #{tpu_custom_call.1} parent=1 // pred_fallthru
      _
    // Predicated region
    $region6: #{tpu_custom_call.1} parent=1 // pred_check
      _
    $region7: #{tpu_custom_call.1} parent=1 // pred_check_branch
      %14 = sbr.rel (0) target = $region9
    $region8: #{tpu_custom_call.1} parent=1 // pred_region
      _
    $region9: #{tpu_custom_call.1} parent=1 // pred_fallthru
      _
    // Predicated region
    $region10: #{tpu_custom_call.1} parent=1 // pred_check
      _
    $region11: #{tpu_custom_call.1} parent=1 // pred_check_branch
      %16 = sbr.rel (0) target = $region13
    $region12: #{tpu_custom_call.1} parent=1 // pred_region
      _
    $region13: #{tpu_custom_call.1} parent=1 // pred_fallthru
      _
    // Predicated region
    $region14: #{tpu_custom_call.1} parent=1 // pred_check
      _
    $region15: #{tpu_custom_call.1} parent=1 // pred_check_branch
      %18 = sbr.rel (0) target = $region17
    $region16: #{tpu_custom_call.1} parent=1 // pred_region
      _
    $region17: #{tpu_custom_call.1} parent=1 // pred_fallthru
      _
    // Predicated region
    $region18: #{tpu_custom_call.1} parent=1 // pred_check
      _
    $region19: #{tpu_custom_call.1} parent=1 // pred_check_branch
      %20 = sbr.rel (0) target = $region21
    $region20: #{tpu_custom_call.1} parent=1 // pred_region
      _
    $region21: #{tpu_custom_call.1} parent=1 // pred_fallthru
      _
    %v21 = vld [vmem:[%s2] sm:$0xff]
    %v22 = vld [vmem:[%s2 + $0x8] sm:$0xff]
    %v23 = vld [vmem:[%s3] sm:$0xff]
    %v24 = vld [vmem:[%s3 + $0x8] sm:$0xff]
    %v25 = vld [vmem:[%s3 + $0x10] sm:$0xff]
    %v26 = vld [vmem:[%s3 + $0x18] sm:$0xff]
    %v27 = vld [vmem:[%s4] sm:$0xff]
    %v28 = vld [vmem:[%s4 + $0x8] sm:$0xff]
    %v29 = vld [vmem:[%s4 + $0x10] sm:$0xff]
    %v30 = vld [vmem:[%s4 + $0x18] sm:$0xff]
    %v31 = vlaneseq
    %v32 = vshrl.u32 %v31, 7
    %v33 = vlaneseq
    %v34 = vand.u32 %v33, 127
    %vm35 = vcmp.eq.s32.totalorder %v32, %v34
    %v36 = vld [vmem:[%s0] sm:$0xff]
    %v37 = vld [vmem:[%s1] sm:$0x3]
    %v38 = vunpack.c.0.s8 %v37
    %vm39 = vcmp.ne.s32.totalorder %v38, 0
    %vm40 = vmor %vm39, %vm35
    %vm41 = vcmask 130048
    %v43 = vsel %vm41, %v36, 0
    %45 = vmatprep.subr.mxu0 0.0
    %46 = vmatpush1.msra.mxu0 0.0
    %47 = vmatprep.subr.mxu0 0.0
    %48 = vmatpush1.msra.mxu0 0.0
    %49 = vmatprep.subr.mxu0 0.0
    %50 = vmatpush1.msra.mxu0 0.0
    %51 = vmatprep.subr.mxu0 0.0
    %52 = vmatpush1.msra.mxu0 0.0
    %53 = vmatprep.subr.mxu0 0.0
    %54 = vmatpush1.msra.mxu0 0.0
    %55 = vmatprep.subr.mxu0 0.0
    %56 = vmatpush1.msra.mxu0 0.0
    %57 = vmatprep.subr.mxu0 0.0
    %58 = vmatpush1.msra.mxu0 0.0
    %59 = vmatprep.subr.mxu0 0.0
    %60 = vmatpush1.msra.mxu0 0.0
    %61 = vmatprep.subr.mxu0 0.0
    %62 = vmatpush1.msra.mxu0 0.0
    %63 = vmatprep.subr.mxu0 0.0
    %64 = vmatpush1.msra.mxu0 0.0
    %65 = vmatprep.subr.mxu0 0.0
    %66 = vmatpush1.msra.mxu0 0.0
    %67 = vmatprep.subr.mxu0 0.0
    %68 = vmatpush1.msra.mxu0 0.0
    %69 = vmatprep.subr.mxu0 0.0
    %70 = vmatpush1.msra.mxu0 0.0
    %71 = vmatprep.subr.mxu0 0.0
    %72 = vmatpush1.msra.mxu0 0.0
    %73 = vmatprep.subr.mxu0 0.0
    %74 = vmatpush1.msra.mxu0 %v22
    %75 = vmatprep.subr.mxu0 0.0
    %76 = vmatpush1.msra.mxu0 %v21
    %77 = vmatprep.subr.mxu0 0.0
    %78 = vmatpush2.msra.mxu0 0.0
    %79 = vmatprep.subr.mxu0 0.0
    %80 = vmatpush2.msra.mxu0 0.0
    %81 = vmatprep.subr.mxu0 0.0
    %82 = vmatpush2.msra.mxu0 0.0
    %83 = vmatprep.subr.mxu0 0.0
    %84 = vmatpush2.msra.mxu0 0.0
    %85 = vmatprep.subr.mxu0 0.0
    %86 = vmatpush2.msra.mxu0 0.0
    %87 = vmatprep.subr.mxu0 0.0
    %88 = vmatpush2.msra.mxu0 0.0
    %89 = vmatprep.subr.mxu0 0.0
    %90 = vmatpush2.msra.mxu0 0.0
    %91 = vmatprep.subr.mxu0 0.0
    %92 = vmatpush2.msra.mxu0 0.0
    %93 = vmatprep.subr.mxu0 0.0
    %94 = vmatpush2.msra.mxu0 0.0
    %95 = vmatprep.subr.mxu0 0.0
    %96 = vmatpush2.msra.mxu0 0.0
    %97 = vmatprep.subr.mxu0 0.0
    %98 = vmatpush2.msra.mxu0 0.0
    %99 = vmatprep.subr.mxu0 0.0
    %100 = vmatpush2.msra.mxu0 0.0
    %101 = vmatprep.subr.mxu0 0.0
    %102 = vmatpush2.msra.mxu0 0.0
    %103 = vmatprep.subr.mxu0 0.0
    %104 = vmatpush2.msra.mxu0 0.0
    %105 = vmatprep.subr.mxu0 0.0
    %106 = vmatpush2.msra.mxu0 0.0
    %107 = vmatprep.subr.mxu0 0.0
    %108 = vmatpush2.msra.mxu0 0.0
    %109 = vmatprep.mubr.f32.mxu0 0.0
    %110 = vmatmul.mubr.f32.gmra.mxu0 %v43
    %v111 = vpop.f32.mrf.mxu0
    %v112 = vadd.f32 0.0, %v111
    %v113 = vpop.f32.mrf.mxu0
    %114 = vdwg.mxu0
    %vm115 = vcmask 261120
    %v117 = vsel %vm115, %v112, 0
    %119 = vmatprep.subr.mxu0 0.0
    %120 = vmatpush1.msra.mxu0 0.0
    %121 = vmatprep.subr.mxu0 0.0
    %122 = vmatpush1.msra.mxu0 0.0
    %123 = vmatprep.subr.mxu0 0.0
    %124 = vmatpush1.msra.mxu0 0.0
    %125 = vmatprep.subr.mxu0 0.0
    %126 = vmatpush1.msra.mxu0 0.0
    %127 = vmatprep.subr.mxu0 0.0
    %128 = vmatpush1.msra.mxu0 0.0
    %129 = vmatprep.subr.mxu0 0.0
    %130 = vmatpush1.msra.mxu0 0.0
    %131 = vmatprep.subr.mxu0 0.0
    %132 = vmatpush1.msra.mxu0 0.0
    %133 = vmatprep.subr.mxu0 0.0
    %134 = vmatpush1.msra.mxu0 0.0
    %135 = vmatprep.subr.mxu0 0.0
    %136 = vmatpush1.msra.mxu0 0.0
    %137 = vmatprep.subr.mxu0 0.0
    %138 = vmatpush1.msra.mxu0 0.0
    %139 = vmatprep.subr.mxu0 0.0
    %140 = vmatpush1.msra.mxu0 0.0
    %141 = vmatprep.subr.mxu0 0.0
    %142 = vmatpush1.msra.mxu0 0.0
    %143 = vmatprep.subr.mxu0 0.0
    %144 = vmatpush1.msra.mxu0 %v26
    %145 = vmatprep.subr.mxu0 0.0
    %146 = vmatpush1.msra.mxu0 %v25
    %147 = vmatprep.subr.mxu0 0.0
    %148 = vmatpush1.msra.mxu0 %v24
    %149 = vmatprep.subr.mxu0 0.0
    %150 = vmatpush1.msra.mxu0 %v23
    %151 = vmatprep.subr.mxu0 0.0
    %152 = vmatpush2.msra.mxu0 0.0
    %153 = vmatprep.subr.mxu0 0.0
    %154 = vmatpush2.msra.mxu0 0.0
    %155 = vmatprep.subr.mxu0 0.0
    %156 = vmatpush2.msra.mxu0 0.0
    %157 = vmatprep.subr.mxu0 0.0
    %158 = vmatpush2.msra.mxu0 0.0
    %159 = vmatprep.subr.mxu0 0.0
    %160 = vmatpush2.msra.mxu0 0.0
    %161 = vmatprep.subr.mxu0 0.0
    %162 = vmatpush2.msra.mxu0 0.0
    %163 = vmatprep.subr.mxu0 0.0
    %164 = vmatpush2.msra.mxu0 0.0
    %165 = vmatprep.subr.mxu0 0.0
    %166 = vmatpush2.msra.mxu0 0.0
    %167 = vmatprep.subr.mxu0 0.0
    %168 = vmatpush2.msra.mxu0 0.0
    %169 = vmatprep.subr.mxu0 0.0
    %170 = vmatpush2.msra.mxu0 0.0
    %171 = vmatprep.subr.mxu0 0.0
    %172 = vmatpush2.msra.mxu0 0.0
    %173 = vmatprep.subr.mxu0 0.0
    %174 = vmatpush2.msra.mxu0 0.0
    %175 = vmatprep.subr.mxu0 0.0
    %176 = vmatpush2.msra.mxu0 0.0
    %177 = vmatprep.subr.mxu0 0.0
    %178 = vmatpush2.msra.mxu0 0.0
    %179 = vmatprep.subr.mxu0 0.0
    %180 = vmatpush2.msra.mxu0 0.0
    %181 = vmatprep.subr.mxu0 0.0
    %182 = vmatpush2.msra.mxu0 0.0
    %183 = vmatprep.mubr.f32.mxu0 0.0
    %184 = vmatmul.mubr.f32.gmra.mxu0 %v117
    %v185 = vpop.f32.mrf.mxu0
    %v186 = vadd.f32 0.0, %v185
    %v187 = vpop.f32.mrf.mxu0
    %188 = vdwg.mxu0
    %189 = vmatprep.subr.mxu0 0.0
    %190 = vmatpush1.msra.mxu0 0.0
    %191 = vmatprep.subr.mxu0 0.0
    %192 = vmatpush1.msra.mxu0 0.0
    %193 = vmatprep.subr.mxu0 0.0
    %194 = vmatpush1.msra.mxu0 0.0
    %195 = vmatprep.subr.mxu0 0.0
    %196 = vmatpush1.msra.mxu0 0.0
    %197 = vmatprep.subr.mxu0 0.0
    %198 = vmatpush1.msra.mxu0 0.0
    %199 = vmatprep.subr.mxu0 0.0
    %200 = vmatpush1.msra.mxu0 0.0
    %201 = vmatprep.subr.mxu0 0.0
    %202 = vmatpush1.msra.mxu0 0.0
    %203 = vmatprep.subr.mxu0 0.0
    %204 = vmatpush1.msra.mxu0 0.0
    %205 = vmatprep.subr.mxu0 0.0
    %206 = vmatpush1.msra.mxu0 0.0
    %207 = vmatprep.subr.mxu0 0.0
    %208 = vmatpush1.msra.mxu0 0.0
    %209 = vmatprep.subr.mxu0 0.0
    %210 = vmatpush1.msra.mxu0 0.0
    %211 = vmatprep.subr.mxu0 0.0
    %212 = vmatpush1.msra.mxu0 0.0
    %213 = vmatprep.subr.mxu0 0.0
    %214 = vmatpush1.msra.mxu0 %v30
    %215 = vmatprep.subr.mxu0 0.0
    %216 = vmatpush1.msra.mxu0 %v29
    %217 = vmatprep.subr.mxu0 0.0
    %218 = vmatpush1.msra.mxu0 %v28
    %219 = vmatprep.subr.mxu0 0.0
    %220 = vmatpush1.msra.mxu0 %v27
    %221 = vmatprep.subr.mxu0 0.0
    %222 = vmatpush2.msra.mxu0 0.0
    %223 = vmatprep.subr.mxu0 0.0
    %224 = vmatpush2.msra.mxu0 0.0
    %225 = vmatprep.subr.mxu0 0.0
    %226 = vmatpush2.msra.mxu0 0.0
    %227 = vmatprep.subr.mxu0 0.0
    %228 = vmatpush2.msra.mxu0 0.0
    %229 = vmatprep.subr.mxu0 0.0
    %230 = vmatpush2.msra.mxu0 0.0
    %231 = vmatprep.subr.mxu0 0.0
    %232 = vmatpush2.msra.mxu0 0.0
    %233 = vmatprep.subr.mxu0 0.0
    %234 = vmatpush2.msra.mxu0 0.0
    %235 = vmatprep.subr.mxu0 0.0
    %236 = vmatpush2.msra.mxu0 0.0
    %237 = vmatprep.subr.mxu0 0.0
    %238 = vmatpush2.msra.mxu0 0.0
    %239 = vmatprep.subr.mxu0 0.0
    %240 = vmatpush2.msra.mxu0 0.0
    %241 = vmatprep.subr.mxu0 0.0
    %242 = vmatpush2.msra.mxu0 0.0
    %243 = vmatprep.subr.mxu0 0.0
    %244 = vmatpush2.msra.mxu0 0.0
    %245 = vmatprep.subr.mxu0 0.0
    %246 = vmatpush2.msra.mxu0 0.0
    %247 = vmatprep.subr.mxu0 0.0
    %248 = vmatpush2.msra.mxu0 0.0
    %249 = vmatprep.subr.mxu0 0.0
    %250 = vmatpush2.msra.mxu0 0.0
    %251 = vmatprep.subr.mxu0 0.0
    %252 = vmatpush2.msra.mxu0 0.0
    %253 = vmatprep.mubr.f32.mxu0 0.0
    %254 = vmatmul.mubr.f32.gmra.mxu0 %v117
    %v255 = vpop.f32.mrf.mxu0
    %v256 = vadd.f32 0.0, %v255
    %v257 = vpop.f32.mrf.mxu0
    %258 = vdwg.mxu0
    %259 = vxpose.xlu0.b32.start [1/16] %v256, 128
    %260 = vxpose.xlu0.b32.cont [2/16] 0.0, 128
    %261 = vxpose.xlu0.b32.cont [3/16] 0.0, 128
    %262 = vxpose.xlu0.b32.cont [4/16] 0.0, 128
    %263 = vxpose.xlu0.b32.cont [5/16] 0.0, 128
    %264 = vxpose.xlu0.b32.cont [6/16] 0.0, 128
    %265 = vxpose.xlu0.b32.cont [7/16] 0.0, 128
    %266 = vxpose.xlu0.b32.cont [8/16] 0.0, 128
    %267 = vxpose.xlu0.b32.cont [9/16] 0.0, 128
    %268 = vxpose.xlu0.b32.cont [10/16] 0.0, 128
    %269 = vxpose.xlu0.b32.cont [11/16] 0.0, 128
    %270 = vxpose.xlu0.b32.cont [12/16] 0.0, 128
    %271 = vxpose.xlu0.b32.cont [13/16] 0.0, 128
    %272 = vxpose.xlu0.b32.cont [14/16] 0.0, 128
    %273 = vxpose.xlu0.b32.cont [15/16] 0.0, 128
    %274 = vxpose.xlu0.b32.end [16/16] 0.0, 128
    %v275 = vpop.trf.xlu0
    %v276 = vpop.trf.xlu0
    %v277 = vpop.trf.xlu0
    %v278 = vpop.trf.xlu0
    %v279 = vpop.trf.xlu0
    %v280 = vpop.trf.xlu0
    %v281 = vpop.trf.xlu0
    %v282 = vpop.trf.xlu0
    %v283 = vpop.trf.xlu0
    %v284 = vpop.trf.xlu0
    %v285 = vpop.trf.xlu0
    %v286 = vpop.trf.xlu0
    %v287 = vpop.trf.xlu0
    %v288 = vpop.trf.xlu0
    %v289 = vpop.trf.xlu0
    %v290 = vpop.trf.xlu0
    %292 = vset.pattern.permute.xlu0 0
    %293 = vperm.xlu0 %292, %v186
    %v294 = vpop.permute.xlu0 %293
    %v296 = vlaneseq
    %v297 = vshrl.u32 %v296, 7
    %v298 = vsub.s32 0, %v297
    %v299 = vrot.slane %v275, %v298
    %v300 = vadd.f32 %v294, %v299
    %vm301 = vcmp.ge.f32.partialorder %v300, 0.0
    %v302 = vmul.f32 %v300, 0.2
    %v303 = vsel %vm301, %v300, %v302
    %v304 = vsel %vm40, %v303, -1e+10
    %vm305 = vcmask 64512
    %v306 = vsel %vm305, %v304, -inf
    %307 = vmax.xlane.f32.xlu0 %v306
    %v308 = vpop.xlane.xlu0 %307
    %v309 = vsub.f32 %v304, %v308
    %v310 = vmul.f32 %v309, 1.442695
    %v311 = vpow.pop %v310
    %v312 = vsel %vm305, %v311, 0.0
    %313 = vadd.xlane.f32.xlu0 %v312
    %v314 = vpop.xlane.xlu0 %313
    %v315 = vmul.f32 %v314, 4.0
    %v316 = vrcp.pop %v315
    %v317 = vmul.f32 %v311, %v316
    %318 = vset.pattern.permute.xlu0 1
    %319 = vperm.xlu0 %318, %v186
    %v320 = vpop.permute.xlu0 %319
    %v322 = vlaneseq
    %v323 = vshrl.u32 %v322, 7
    %v324 = vsub.s32 1, %v323
    %v325 = vrot.slane %v275, %v324
    %v326 = vadd.f32 %v320, %v325
    %vm327 = vcmp.ge.f32.partialorder %v326, 0.0
    %v328 = vmul.f32 %v326, 0.2
    %v329 = vsel %vm327, %v326, %v328
    %v330 = vsel %vm40, %v329, -1e+10
    %v331 = vsel %vm305, %v330, -inf
    %332 = vmax.xlane.f32.xlu0 %v331
    %v333 = vpop.xlane.xlu0 %332
    %v334 = vsub.f32 %v330, %v333
    %v335 = vmul.f32 %v334, 1.442695
    %v336 = vpow.pop %v335
    %v337 = vsel %vm305, %v336, 0.0
    %338 = vadd.xlane.f32.xlu0 %v337
    %v339 = vpop.xlane.xlu0 %338
    %v340 = vmul.f32 %v339, 4.0
    %v341 = vrcp.pop %v340
    %v342 = vmul.f32 %v336, %v341
    %343 = vset.pattern.permute.xlu0 2
    %344 = vperm.xlu0 %343, %v186
    %v345 = vpop.permute.xlu0 %344
    %v347 = vlaneseq
    %v348 = vshrl.u32 %v347, 7
    %v349 = vsub.s32 2, %v348
    %v350 = vrot.slane %v275, %v349
    %v351 = vadd.f32 %v345, %v350
    %vm352 = vcmp.ge.f32.partialorder %v351, 0.0
    %v353 = vmul.f32 %v351, 0.2
    %v354 = vsel %vm352, %v351, %v353
    %v355 = vsel %vm40, %v354, -1e+10
    %v356 = vsel %vm305, %v355, -inf
    %357 = vmax.xlane.f32.xlu0 %v356
    %v358 = vpop.xlane.xlu0 %357
    %v359 = vsub.f32 %v355, %v358
    %v360 = vmul.f32 %v359, 1.442695
    %v361 = vpow.pop %v360
    %v362 = vsel %vm305, %v361, 0.0
    %363 = vadd.xlane.f32.xlu0 %v362
    %v364 = vpop.xlane.xlu0 %363
    %v365 = vmul.f32 %v364, 4.0
    %v366 = vrcp.pop %v365
    %v367 = vmul.f32 %v361, %v366
    %368 = vset.pattern.permute.xlu0 3
    %369 = vperm.xlu0 %368, %v186
    %v370 = vpop.permute.xlu0 %369
    %v372 = vlaneseq
    %v373 = vshrl.u32 %v372, 7
    %v374 = vsub.s32 3, %v373
    %v375 = vrot.slane %v275, %v374
    %v376 = vadd.f32 %v370, %v375
    %vm377 = vcmp.ge.f32.partialorder %v376, 0.0
    %v378 = vmul.f32 %v376, 0.2
    %v379 = vsel %vm377, %v376, %v378
    %v380 = vsel %vm40, %v379, -1e+10
    %v381 = vsel %vm305, %v380, -inf
    %382 = vmax.xlane.f32.xlu0 %v381
    %v383 = vpop.xlane.xlu0 %382
    %v384 = vsub.f32 %v380, %v383
    %v385 = vmul.f32 %v384, 1.442695
    %v386 = vpow.pop %v385
    %v387 = vsel %vm305, %v386, 0.0
    %388 = vadd.xlane.f32.xlu0 %v387
    %v389 = vpop.xlane.xlu0 %388
    %v390 = vmul.f32 %v389, 4.0
    %v391 = vrcp.pop %v390
    %v392 = vmul.f32 %v386, %v391
    %394 = vrot.lane.b32.xlu0 %v342, 8
    %v395 = vpop.permute.xlu0 %394
    %398 = vrot.lane.b32.xlu0 %v367, 16
    %v399 = vpop.permute.xlu0 %398
    %402 = vrot.lane.b32.xlu0 %v392, 24
    %v403 = vpop.permute.xlu0 %402
    %v405 = vsel %vm305, %v317, %v395
    %v406 = vsel %vm41, %v405, %v399
    %vm407 = vcmask 195584
    %v408 = vsel %vm407, %v406, %v403
    %409 = vrot.lane.b32.xlu0 %v112, 120
    %v410 = vpop.permute.xlu0 %409
    %412 = vrot.lane.b32.xlu0 %v112, 112
    %v413 = vpop.permute.xlu0 %412
    %415 = vrot.lane.b32.xlu0 %v112, 104
    %v416 = vpop.permute.xlu0 %415
    %v419 = vsel %vm115, %v408, 0
    %421 = vmatprep.subr.mxu0 0.0
    %422 = vmatpush1.msra.mxu0 0.0
    %423 = vmatprep.subr.mxu0 0.0
    %424 = vmatpush1.msra.mxu0 0.0
    %425 = vmatprep.subr.mxu0 0.0
    %426 = vmatpush1.msra.mxu0 0.0
    %427 = vmatprep.subr.mxu0 0.0
    %428 = vmatpush1.msra.mxu0 0.0
    %429 = vmatprep.subr.mxu0 0.0
    %430 = vmatpush1.msra.mxu0 0.0
    %431 = vmatprep.subr.mxu0 0.0
    %432 = vmatpush1.msra.mxu0 0.0
    %433 = vmatprep.subr.mxu0 0.0
    %434 = vmatpush1.msra.mxu0 0.0
    %435 = vmatprep.subr.mxu0 0.0
    %436 = vmatpush1.msra.mxu0 0.0
    %437 = vmatprep.subr.mxu0 0.0
    %438 = vmatpush1.msra.mxu0 0.0
    %439 = vmatprep.subr.mxu0 0.0
    %440 = vmatpush1.msra.mxu0 0.0
    %441 = vmatprep.subr.mxu0 0.0
    %442 = vmatpush1.msra.mxu0 0.0
    %443 = vmatprep.subr.mxu0 0.0
    %444 = vmatpush1.msra.mxu0 0.0
    %445 = vmatprep.subr.mxu0 0.0
    %446 = vmatpush1.msra.mxu0 %v416
    %447 = vmatprep.subr.mxu0 0.0
    %448 = vmatpush1.msra.mxu0 %v413
    %449 = vmatprep.subr.mxu0 0.0
    %450 = vmatpush1.msra.mxu0 %v410
    %451 = vmatprep.subr.mxu0 0.0
    %452 = vmatpush1.msra.mxu0 %v112
    %453 = vmatprep.subr.mxu0 0.0
    %454 = vmatpush2.msra.mxu0 0.0
    %455 = vmatprep.subr.mxu0 0.0
    %456 = vmatpush2.msra.mxu0 0.0
    %457 = vmatprep.subr.mxu0 0.0
    %458 = vmatpush2.msra.mxu0 0.0
    %459 = vmatprep.subr.mxu0 0.0
    %460 = vmatpush2.msra.mxu0 0.0
    %461 = vmatprep.subr.mxu0 0.0
    %462 = vmatpush2.msra.mxu0 0.0
    %463 = vmatprep.subr.mxu0 0.0
    %464 = vmatpush2.msra.mxu0 0.0
    %465 = vmatprep.subr.mxu0 0.0
    %466 = vmatpush2.msra.mxu0 0.0
    %467 = vmatprep.subr.mxu0 0.0
    %468 = vmatpush2.msra.mxu0 0.0
    %469 = vmatprep.subr.mxu0 0.0
    %470 = vmatpush2.msra.mxu0 0.0
    %471 = vmatprep.subr.mxu0 0.0
    %472 = vmatpush2.msra.mxu0 0.0
    %473 = vmatprep.subr.mxu0 0.0
    %474 = vmatpush2.msra.mxu0 0.0
    %475 = vmatprep.subr.mxu0 0.0
    %476 = vmatpush2.msra.mxu0 0.0
    %477 = vmatprep.subr.mxu0 0.0
    %478 = vmatpush2.msra.mxu0 0.0
    %479 = vmatprep.subr.mxu0 0.0
    %480 = vmatpush2.msra.mxu0 0.0
    %481 = vmatprep.subr.mxu0 0.0
    %482 = vmatpush2.msra.mxu0 0.0
    %483 = vmatprep.subr.mxu0 0.0
    %484 = vmatpush2.msra.mxu0 0.0
    %485 = vmatprep.mubr.f32.mxu0 0.0
    %486 = vmatmul.mubr.f32.gmra.mxu0 %v419
    %v487 = vpop.f32.mrf.mxu0
    %v488 = vadd.f32 0.0, %v487
    %v489 = vpop.f32.mrf.mxu0
    %490 = vdwg.mxu0
    %491 = vst.msk [vmem:[#allocation2] sm:$0xff] %vm305, %v488
    %s492 = scalar_lea.vmem %s0, 8
    %v493 = vld [vmem:[%s492] sm:$0xff]
    %s494 = scalar_lea.vmem %s1, 2
    %v495 = vld [vmem:[%s494] sm:$0x3]
    %v496 = vunpack.c.0.s8 %v495
    %vm497 = vcmp.ne.s32.totalorder %v496, 0
    %vm498 = vmor %vm497, %vm35
    %v500 = vsel %vm41, %v493, 0
    %502 = vmatprep.subr.mxu0 0.0
    %503 = vmatpush1.msra.mxu0 0.0
    %504 = vmatprep.subr.mxu0 0.0
    %505 = vmatpush1.msra.mxu0 0.0
    %506 = vmatprep.subr.mxu0 0.0
    %507 = vmatpush1.msra.mxu0 0.0
    %508 = vmatprep.subr.mxu0 0.0
    %509 = vmatpush1.msra.mxu0 0.0
    %510 = vmatprep.subr.mxu0 0.0
    %511 = vmatpush1.msra.mxu0 0.0
    %512 = vmatprep.subr.mxu0 0.0
    %513 = vmatpush1.msra.mxu0 0.0
    %514 = vmatprep.subr.mxu0 0.0
    %515 = vmatpush1.msra.mxu0 0.0
    %516 = vmatprep.subr.mxu0 0.0
    %517 = vmatpush1.msra.mxu0 0.0
    %518 = vmatprep.subr.mxu0 0.0
    %519 = vmatpush1.msra.mxu0 0.0
    %520 = vmatprep.subr.mxu0 0.0
    %521 = vmatpush1.msra.mxu0 0.0
    %522 = vmatprep.subr.mxu0 0.0
    %523 = vmatpush1.msra.mxu0 0.0
    %524 = vmatprep.subr.mxu0 0.0
    %525 = vmatpush1.msra.mxu0 0.0
    %526 = vmatprep.subr.mxu0 0.0
    %527 = vmatpush1.msra.mxu0 0.0
    %528 = vmatprep.subr.mxu0 0.0
    %529 = vmatpush1.msra.mxu0 0.0
    %530 = vmatprep.subr.mxu0 0.0
    %531 = vmatpush1.msra.mxu0 %v22
    %532 = vmatprep.subr.mxu0 0.0
    %533 = vmatpush1.msra.mxu0 %v21
    %534 = vmatprep.subr.mxu0 0.0
    %535 = vmatpush2.msra.mxu0 0.0
    %536 = vmatprep.subr.mxu0 0.0
    %537 = vmatpush2.msra.mxu0 0.0
    %538 = vmatprep.subr.mxu0 0.0
    %539 = vmatpush2.msra.mxu0 0.0
    %540 = vmatprep.subr.mxu0 0.0
    %541 = vmatpush2.msra.mxu0 0.0
    %542 = vmatprep.subr.mxu0 0.0
    %543 = vmatpush2.msra.mxu0 0.0
    %544 = vmatprep.subr.mxu0 0.0
    %545 = vmatpush2.msra.mxu0 0.0
    %546 = vmatprep.subr.mxu0 0.0
    %547 = vmatpush2.msra.mxu0 0.0
    %548 = vmatprep.subr.mxu0 0.0
    %549 = vmatpush2.msra.mxu0 0.0
    %550 = vmatprep.subr.mxu0 0.0
    %551 = vmatpush2.msra.mxu0 0.0
    %552 = vmatprep.subr.mxu0 0.0
    %553 = vmatpush2.msra.mxu0 0.0
    %554 = vmatprep.subr.mxu0 0.0
    %555 = vmatpush2.msra.mxu0 0.0
    %556 = vmatprep.subr.mxu0 0.0
    %557 = vmatpush2.msra.mxu0 0.0
    %558 = vmatprep.subr.mxu0 0.0
    %559 = vmatpush2.msra.mxu0 0.0
    %560 = vmatprep.subr.mxu0 0.0
    %561 = vmatpush2.msra.mxu0 0.0
    %562 = vmatprep.subr.mxu0 0.0
    %563 = vmatpush2.msra.mxu0 0.0
    %564 = vmatprep.subr.mxu0 0.0
    %565 = vmatpush2.msra.mxu0 0.0
    %566 = vmatprep.mubr.f32.mxu0 0.0
    %567 = vmatmul.mubr.f32.gmra.mxu0 %v500
    %v568 = vpop.f32.mrf.mxu0
    %v569 = vadd.f32 0.0, %v568
    %v570 = vpop.f32.mrf.mxu0
    %571 = vdwg.mxu0
    %v573 = vsel %vm115, %v569, 0
    %575 = vmatprep.subr.mxu0 0.0
    %576 = vmatpush1.msra.mxu0 0.0
    %577 = vmatprep.subr.mxu0 0.0
    %578 = vmatpush1.msra.mxu0 0.0
    %579 = vmatprep.subr.mxu0 0.0
    %580 = vmatpush1.msra.mxu0 0.0
    %581 = vmatprep.subr.mxu0 0.0
    %582 = vmatpush1.msra.mxu0 0.0
    %583 = vmatprep.subr.mxu0 0.0
    %584 = vmatpush1.msra.mxu0 0.0
    %585 = vmatprep.subr.mxu0 0.0
    %586 = vmatpush1.msra.mxu0 0.0
    %587 = vmatprep.subr.mxu0 0.0
    %588 = vmatpush1.msra.mxu0 0.0
    %589 = vmatprep.subr.mxu0 0.0
    %590 = vmatpush1.msra.mxu0 0.0
    %591 = vmatprep.subr.mxu0 0.0
    %592 = vmatpush1.msra.mxu0 0.0
    %593 = vmatprep.subr.mxu0 0.0
    %594 = vmatpush1.msra.mxu0 0.0
    %595 = vmatprep.subr.mxu0 0.0
    %596 = vmatpush1.msra.mxu0 0.0
    %597 = vmatprep.subr.mxu0 0.0
    %598 = vmatpush1.msra.mxu0 0.0
    %599 = vmatprep.subr.mxu0 0.0
    %600 = vmatpush1.msra.mxu0 %v26
    %601 = vmatprep.subr.mxu0 0.0
    %602 = vmatpush1.msra.mxu0 %v25
    %603 = vmatprep.subr.mxu0 0.0
    %604 = vmatpush1.msra.mxu0 %v24
    %605 = vmatprep.subr.mxu0 0.0
    %606 = vmatpush1.msra.mxu0 %v23
    %607 = vmatprep.subr.mxu0 0.0
    %608 = vmatpush2.msra.mxu0 0.0
    %609 = vmatprep.subr.mxu0 0.0
    %610 = vmatpush2.msra.mxu0 0.0
    %611 = vmatprep.subr.mxu0 0.0
    %612 = vmatpush2.msra.mxu0 0.0
    %613 = vmatprep.subr.mxu0 0.0
    %614 = vmatpush2.msra.mxu0 0.0
    %615 = vmatprep.subr.mxu0 0.0
    %616 = vmatpush2.msra.mxu0 0.0
    %617 = vmatprep.subr.mxu0 0.0
    %618 = vmatpush2.msra.mxu0 0.0
    %619 = vmatprep.subr.mxu0 0.0
    %620 = vmatpush2.msra.mxu0 0.0
    %621 = vmatprep.subr.mxu0 0.0
    %622 = vmatpush2.msra.mxu0 0.0
    %623 = vmatprep.subr.mxu0 0.0
    %624 = vmatpush2.msra.mxu0 0.0
    %625 = vmatprep.subr.mxu0 0.0
    %626 = vmatpush2.msra.mxu0 0.0
    %627 = vmatprep.subr.mxu0 0.0
    %628 = vmatpush2.msra.mxu0 0.0
    %629 = vmatprep.subr.mxu0 0.0
    %630 = vmatpush2.msra.mxu0 0.0
    %631 = vmatprep.subr.mxu0 0.0
    %632 = vmatpush2.msra.mxu0 0.0
    %633 = vmatprep.subr.mxu0 0.0
    %634 = vmatpush2.msra.mxu0 0.0
    %635 = vmatprep.subr.mxu0 0.0
    %636 = vmatpush2.msra.mxu0 0.0
    %637 = vmatprep.subr.mxu0 0.0
    %638 = vmatpush2.msra.mxu0 0.0
    %639 = vmatprep.mubr.f32.mxu0 0.0
    %640 = vmatmul.mubr.f32.gmra.mxu0 %v573
    %v641 = vpop.f32.mrf.mxu0
    %v642 = vadd.f32 0.0, %v641
    %v643 = vpop.f32.mrf.mxu0
    %644 = vdwg.mxu0
    %645 = vmatprep.subr.mxu0 0.0
    %646 = vmatpush1.msra.mxu0 0.0
    %647 = vmatprep.subr.mxu0 0.0
    %648 = vmatpush1.msra.mxu0 0.0
    %649 = vmatprep.subr.mxu0 0.0
    %650 = vmatpush1.msra.mxu0 0.0
    %651 = vmatprep.subr.mxu0 0.0
    %652 = vmatpush1.msra.mxu0 0.0
    %653 = vmatprep.subr.mxu0 0.0
    %654 = vmatpush1.msra.mxu0 0.0
    %655 = vmatprep.subr.mxu0 0.0
    %656 = vmatpush1.msra.mxu0 0.0
    %657 = vmatprep.subr.mxu0 0.0
    %658 = vmatpush1.msra.mxu0 0.0
    %659 = vmatprep.subr.mxu0 0.0
    %660 = vmatpush1.msra.mxu0 0.0
    %661 = vmatprep.subr.mxu0 0.0
    %662 = vmatpush1.msra.mxu0 0.0
    %663 = vmatprep.subr.mxu0 0.0
    %664 = vmatpush1.msra.mxu0 0.0
    %665 = vmatprep.subr.mxu0 0.0
    %666 = vmatpush1.msra.mxu0 0.0
    %667 = vmatprep.subr.mxu0 0.0
    %668 = vmatpush1.msra.mxu0 0.0
    %669 = vmatprep.subr.mxu0 0.0
    %670 = vmatpush1.msra.mxu0 %v30
    %671 = vmatprep.subr.mxu0 0.0
    %672 = vmatpush1.msra.mxu0 %v29
    %673 = vmatprep.subr.mxu0 0.0
    %674 = vmatpush1.msra.mxu0 %v28
    %675 = vmatprep.subr.mxu0 0.0
    %676 = vmatpush1.msra.mxu0 %v27
    %677 = vmatprep.subr.mxu0 0.0
    %678 = vmatpush2.msra.mxu0 0.0
    %679 = vmatprep.subr.mxu0 0.0
    %680 = vmatpush2.msra.mxu0 0.0
    %681 = vmatprep.subr.mxu0 0.0
    %682 = vmatpush2.msra.mxu0 0.0
    %683 = vmatprep.subr.mxu0 0.0
    %684 = vmatpush2.msra.mxu0 0.0
    %685 = vmatprep.subr.mxu0 0.0
    %686 = vmatpush2.msra.mxu0 0.0
    %687 = vmatprep.subr.mxu0 0.0
    %688 = vmatpush2.msra.mxu0 0.0
    %689 = vmatprep.subr.mxu0 0.0
    %690 = vmatpush2.msra.mxu0 0.0
    %691 = vmatprep.subr.mxu0 0.0
    %692 = vmatpush2.msra.mxu0 0.0
    %693 = vmatprep.subr.mxu0 0.0
    %694 = vmatpush2.msra.mxu0 0.0
    %695 = vmatprep.subr.mxu0 0.0
    %696 = vmatpush2.msra.mxu0 0.0
    %697 = vmatprep.subr.mxu0 0.0
    %698 = vmatpush2.msra.mxu0 0.0
    %699 = vmatprep.subr.mxu0 0.0
    %700 = vmatpush2.msra.mxu0 0.0
    %701 = vmatprep.subr.mxu0 0.0
    %702 = vmatpush2.msra.mxu0 0.0
    %703 = vmatprep.subr.mxu0 0.0
    %704 = vmatpush2.msra.mxu0 0.0
    %705 = vmatprep.subr.mxu0 0.0
    %706 = vmatpush2.msra.mxu0 0.0
    %707 = vmatprep.subr.mxu0 0.0
    %708 = vmatpush2.msra.mxu0 0.0
    %709 = vmatprep.mubr.f32.mxu0 0.0
    %710 = vmatmul.mubr.f32.gmra.mxu0 %v573
    %v711 = vpop.f32.mrf.mxu0
    %v712 = vadd.f32 0.0, %v711
    %v713 = vpop.f32.mrf.mxu0
    %714 = vdwg.mxu0
    %715 = vxpose.xlu0.b32.start [1/16] %v712, 128
    %716 = vxpose.xlu0.b32.cont [2/16] 0.0, 128
    %717 = vxpose.xlu0.b32.cont [3/16] 0.0, 128
    %718 = vxpose.xlu0.b32.cont [4/16] 0.0, 128
    %719 = vxpose.xlu0.b32.cont [5/16] 0.0, 128
    %720 = vxpose.xlu0.b32.cont [6/16] 0.0, 128
    %721 = vxpose.xlu0.b32.cont [7/16] 0.0, 128
    %722 = vxpose.xlu0.b32.cont [8/16] 0.0, 128
    %723 = vxpose.xlu0.b32.cont [9/16] 0.0, 128
    %724 = vxpose.xlu0.b32.cont [10/16] 0.0, 128
    %725 = vxpose.xlu0.b32.cont [11/16] 0.0, 128
    %726 = vxpose.xlu0.b32.cont [12/16] 0.0, 128
    %727 = vxpose.xlu0.b32.cont [13/16] 0.0, 128
    %728 = vxpose.xlu0.b32.cont [14/16] 0.0, 128
    %729 = vxpose.xlu0.b32.cont [15/16] 0.0, 128
    %730 = vxpose.xlu0.b32.end [16/16] 0.0, 128
    %v731 = vpop.trf.xlu0
    %v732 = vpop.trf.xlu0
    %v733 = vpop.trf.xlu0
    %v734 = vpop.trf.xlu0
    %v735 = vpop.trf.xlu0
    %v736 = vpop.trf.xlu0
    %v737 = vpop.trf.xlu0
    %v738 = vpop.trf.xlu0
    %v739 = vpop.trf.xlu0
    %v740 = vpop.trf.xlu0
    %v741 = vpop.trf.xlu0
    %v742 = vpop.trf.xlu0
    %v743 = vpop.trf.xlu0
    %v744 = vpop.trf.xlu0
    %v745 = vpop.trf.xlu0
    %v746 = vpop.trf.xlu0
    %748 = vset.pattern.permute.xlu0 0
    %749 = vperm.xlu0 %748, %v642
    %v750 = vpop.permute.xlu0 %749
    %v752 = vlaneseq
    %v753 = vshrl.u32 %v752, 7
    %v754 = vsub.s32 0, %v753
    %v755 = vrot.slane %v731, %v754
    %v756 = vadd.f32 %v750, %v755
    %vm757 = vcmp.ge.f32.partialorder %v756, 0.0
    %v758 = vmul.f32 %v756, 0.2
    %v759 = vsel %vm757, %v756, %v758
    %v760 = vsel %vm498, %v759, -1e+10
    %v761 = vsel %vm305, %v760, -inf
    %762 = vmax.xlane.f32.xlu0 %v761
    %v763 = vpop.xlane.xlu0 %762
    %v764 = vsub.f32 %v760, %v763
    %v765 = vmul.f32 %v764, 1.442695
    %v766 = vpow.pop %v765
    %v767 = vsel %vm305, %v766, 0.0
    %768 = vadd.xlane.f32.xlu0 %v767
    %v769 = vpop.xlane.xlu0 %768
    %v770 = vmul.f32 %v769, 4.0
    %v771 = vrcp.pop %v770
    %v772 = vmul.f32 %v766, %v771
    %773 = vset.pattern.permute.xlu0 1
    %774 = vperm.xlu0 %773, %v642
    %v775 = vpop.permute.xlu0 %774
    %v777 = vlaneseq
    %v778 = vshrl.u32 %v777, 7
    %v779 = vsub.s32 1, %v778
    %v780 = vrot.slane %v731, %v779
    %v781 = vadd.f32 %v775, %v780
    %vm782 = vcmp.ge.f32.partialorder %v781, 0.0
    %v783 = vmul.f32 %v781, 0.2
    %v784 = vsel %vm782, %v781, %v783
    %v785 = vsel %vm498, %v784, -1e+10
    %v786 = vsel %vm305, %v785, -inf
    %787 = vmax.xlane.f32.xlu0 %v786
    %v788 = vpop.xlane.xlu0 %787
    %v789 = vsub.f32 %v785, %v788
    %v790 = vmul.f32 %v789, 1.442695
    %v791 = vpow.pop %v790
    %v792 = vsel %vm305, %v791, 0.0
    %793 = vadd.xlane.f32.xlu0 %v792
    %v794 = vpop.xlane.xlu0 %793
    %v795 = vmul.f32 %v794, 4.0
    %v796 = vrcp.pop %v795
    %v797 = vmul.f32 %v791, %v796
    %798 = vset.pattern.permute.xlu0 2
    %799 = vperm.xlu0 %798, %v642
    %v800 = vpop.permute.xlu0 %799
    %v802 = vlaneseq
    %v803 = vshrl.u32 %v802, 7
    %v804 = vsub.s32 2, %v803
    %v805 = vrot.slane %v731, %v804
    %v806 = vadd.f32 %v800, %v805
    %vm807 = vcmp.ge.f32.partialorder %v806, 0.0
    %v808 = vmul.f32 %v806, 0.2
    %v809 = vsel %vm807, %v806, %v808
    %v810 = vsel %vm498, %v809, -1e+10
    %v811 = vsel %vm305, %v810, -inf
    %812 = vmax.xlane.f32.xlu0 %v811
    %v813 = vpop.xlane.xlu0 %812
    %v814 = vsub.f32 %v810, %v813
    %v815 = vmul.f32 %v814, 1.442695
    %v816 = vpow.pop %v815
    %v817 = vsel %vm305, %v816, 0.0
    %818 = vadd.xlane.f32.xlu0 %v817
    %v819 = vpop.xlane.xlu0 %818
    %v820 = vmul.f32 %v819, 4.0
    %v821 = vrcp.pop %v820
    %v822 = vmul.f32 %v816, %v821
    %823 = vset.pattern.permute.xlu0 3
    %824 = vperm.xlu0 %823, %v642
    %v825 = vpop.permute.xlu0 %824
    %v827 = vlaneseq
    %v828 = vshrl.u32 %v827, 7
    %v829 = vsub.s32 3, %v828
    %v830 = vrot.slane %v731, %v829
    %v831 = vadd.f32 %v825, %v830
    %vm832 = vcmp.ge.f32.partialorder %v831, 0.0
    %v833 = vmul.f32 %v831, 0.2
    %v834 = vsel %vm832, %v831, %v833
    %v835 = vsel %vm498, %v834, -1e+10
    %v836 = vsel %vm305, %v835, -inf
    %837 = vmax.xlane.f32.xlu0 %v836
    %v838 = vpop.xlane.xlu0 %837
    %v839 = vsub.f32 %v835, %v838
    %v840 = vmul.f32 %v839, 1.442695
    %v841 = vpow.pop %v840
    %v842 = vsel %vm305, %v841, 0.0
    %843 = vadd.xlane.f32.xlu0 %v842
    %v844 = vpop.xlane.xlu0 %843
    %v845 = vmul.f32 %v844, 4.0
    %v846 = vrcp.pop %v845
    %v847 = vmul.f32 %v841, %v846
    %849 = vrot.lane.b32.xlu0 %v797, 8
    %v850 = vpop.permute.xlu0 %849
    %853 = vrot.lane.b32.xlu0 %v822, 16
    %v854 = vpop.permute.xlu0 %853
    %857 = vrot.lane.b32.xlu0 %v847, 24
    %v858 = vpop.permute.xlu0 %857
    %v860 = vsel %vm305, %v772, %v850
    %v861 = vsel %vm41, %v860, %v854
    %v862 = vsel %vm407, %v861, %v858
    %863 = vrot.lane.b32.xlu0 %v569, 120
    %v864 = vpop.permute.xlu0 %863
    %866 = vrot.lane.b32.xlu0 %v569, 112
    %v867 = vpop.permute.xlu0 %866
    %869 = vrot.lane.b32.xlu0 %v569, 104
    %v870 = vpop.permute.xlu0 %869
    %v873 = vsel %vm115, %v862, 0
    %875 = vmatprep.subr.mxu0 0.0
    %876 = vmatpush1.msra.mxu0 0.0
    %877 = vmatprep.subr.mxu0 0.0
    %878 = vmatpush1.msra.mxu0 0.0
    %879 = vmatprep.subr.mxu0 0.0
    %880 = vmatpush1.msra.mxu0 0.0
    %881 = vmatprep.subr.mxu0 0.0
    %882 = vmatpush1.msra.mxu0 0.0
    %883 = vmatprep.subr.mxu0 0.0
    %884 = vmatpush1.msra.mxu0 0.0
    %885 = vmatprep.subr.mxu0 0.0
    %886 = vmatpush1.msra.mxu0 0.0
    %887 = vmatprep.subr.mxu0 0.0
    %888 = vmatpush1.msra.mxu0 0.0
    %889 = vmatprep.subr.mxu0 0.0
    %890 = vmatpush1.msra.mxu0 0.0
    %891 = vmatprep.subr.mxu0 0.0
    %892 = vmatpush1.msra.mxu0 0.0
    %893 = vmatprep.subr.mxu0 0.0
    %894 = vmatpush1.msra.mxu0 0.0
    %895 = vmatprep.subr.mxu0 0.0
    %896 = vmatpush1.msra.mxu0 0.0
    %897 = vmatprep.subr.mxu0 0.0
    %898 = vmatpush1.msra.mxu0 0.0
    %899 = vmatprep.subr.mxu0 0.0
    %900 = vmatpush1.msra.mxu0 %v870
    %901 = vmatprep.subr.mxu0 0.0
    %902 = vmatpush1.msra.mxu0 %v867
    %903 = vmatprep.subr.mxu0 0.0
    %904 = vmatpush1.msra.mxu0 %v864
    %905 = vmatprep.subr.mxu0 0.0
    %906 = vmatpush1.msra.mxu0 %v569
    %907 = vmatprep.subr.mxu0 0.0
    %908 = vmatpush2.msra.mxu0 0.0
    %909 = vmatprep.subr.mxu0 0.0
    %910 = vmatpush2.msra.mxu0 0.0
    %911 = vmatprep.subr.mxu0 0.0
    %912 = vmatpush2.msra.mxu0 0.0
    %913 = vmatprep.subr.mxu0 0.0
    %914 = vmatpush2.msra.mxu0 0.0
    %915 = vmatprep.subr.mxu0 0.0
    %916 = vmatpush2.msra.mxu0 0.0
    %917 = vmatprep.subr.mxu0 0.0
    %918 = vmatpush2.msra.mxu0 0.0
    %919 = vmatprep.subr.mxu0 0.0
    %920 = vmatpush2.msra.mxu0 0.0
    %921 = vmatprep.subr.mxu0 0.0
    %922 = vmatpush2.msra.mxu0 0.0
    %923 = vmatprep.subr.mxu0 0.0
    %924 = vmatpush2.msra.mxu0 0.0
    %925 = vmatprep.subr.mxu0 0.0
    %926 = vmatpush2.msra.mxu0 0.0
    %927 = vmatprep.subr.mxu0 0.0
    %928 = vmatpush2.msra.mxu0 0.0
    %929 = vmatprep.subr.mxu0 0.0
    %930 = vmatpush2.msra.mxu0 0.0
    %931 = vmatprep.subr.mxu0 0.0
    %932 = vmatpush2.msra.mxu0 0.0
    %933 = vmatprep.subr.mxu0 0.0
    %934 = vmatpush2.msra.mxu0 0.0
    %935 = vmatprep.subr.mxu0 0.0
    %936 = vmatpush2.msra.mxu0 0.0
    %937 = vmatprep.subr.mxu0 0.0
    %938 = vmatpush2.msra.mxu0 0.0
    %939 = vmatprep.mubr.f32.mxu0 0.0
    %940 = vmatmul.mubr.f32.gmra.mxu0 %v873
    %v941 = vpop.f32.mrf.mxu0
    %v942 = vadd.f32 0.0, %v941
    %v943 = vpop.f32.mrf.mxu0
    %944 = vdwg.mxu0
    %s945 = scalar_lea.vmem [#allocation2], 8
    %946 = vst.msk [vmem:[%s945] sm:$0xff] %vm305, %v942
    // Predicated region
    $region22: #{tpu_custom_call.1} parent=1 // pred_check
      _
    $region23: #{tpu_custom_call.1} parent=1 // pred_check_branch
      %948 = sbr.rel (0) target = $region25
    $region24: #{tpu_custom_call.1} parent=1 // pred_region
      %s950 = ssub.s32 256, 256
      %951 = vsyncadd [#allocation3], %s950
      %s952 = sshll.u32 [#allocation2], 4
      %s953 = int_to_ptr.vmem [resolvable:$true] %s952
      %958 = dma.vmem_to_hbm [thread:$0]  %s953, 256, %s5, [#allocation3], 128, 128, 8
    $region25: #{tpu_custom_call.1} parent=1 // pred_fallthru
      _
    // Predicated region
    $region26: #{tpu_custom_call.1} parent=1 // pred_check
      _
    $region27: #{tpu_custom_call.1} parent=1 // pred_check_branch
      %960 = sbr.rel (0) target = $region29
    $region28: #{tpu_custom_call.1} parent=1 // pred_region
      %961 = dma.done [#allocation3], 256
    $region29: #{tpu_custom_call.1} parent=1 // pred_fallthru
      _
    %962 = vsyncpa [#allocation3], 1

</llo_original>
